<compile_context>
chip_gen: v7x
topology: tpu7x:2x2x1
jax: 0.10.0
libtpu: 0.0.40
codegen_flags: <defaults>
</compile_context>

<pallas_src>
import functools

import jax
import jax.numpy as jnp
from jax.experimental import pallas as pl
from jax.experimental.pallas import tpu as pltpu


def _round_up(n, m):
    return ((n + m - 1) // m) * m


def _tpu_vmem_bytes():
    try:
        cap = getattr(pltpu.get_tpu_info(), "vmem_capacity_bytes", None)
        if cap:
            return int(cap)
    except Exception:
        pass
    return 64 * 1024 * 1024  # conservative (v7x per-TC)


def _select_tiles(B, In, Out, vmem_bytes):
    """Pick lane-dense (TN) / reduction (TK) tiles under a VMEM budget."""
    # Output (lane) tile. Prefer >=2 tiles on the parallel Out axis so v7x's two
    # TensorCores both get work (no effect on 1-TC v5e/v6e).
    TN = 128 if Out <= 256 else 256
    Out_p = _round_up(Out, TN)

    budget = int(vmem_bytes * 0.75)          # headroom for compiler scratch
    out_bytes = B * TN * 4                   # resident f32 output/accumulator
    vec_bytes = 4 * 2 * Out_p * 4            # small per-feature vectors

    In_128 = _round_up(In, 128)
    # Keep the whole (padded, bf16) x batch VMEM-resident when cheap: one HBM pass
    # instead of one pass per Out tile.
    x_resident = (B * In_128 * 2) <= max(budget // 4, 1)

    cands = [c for c in (1024, 512, 256, 128) if c <= In_128] or [128]
    TK = cands[-1]
    for cand in cands:
        In_p = _round_up(In, cand)
        x_bytes = B * In_p * 2 if x_resident else 2 * B * cand * 2
        w_bytes = 2 * TN * cand * 2          # double-buffered bf16 weight tiles
        if out_bytes + vec_bytes + x_bytes + w_bytes <= budget:
            TK = cand
            break
    In_p = _round_up(In, TK)
    return TN, TK, Out_p, In_p, x_resident


def _take_k(x_ref, k, tk, x_resident):
    if x_resident:
        start = pl.multiple_of(k * tk, tk)
        return x_ref[:, pl.ds(start, tk)]
    return x_ref[...]


def _accumulate(x_ref, w_ref, out_ref, k, tk, x_resident):
    part = jax.lax.dot_general(
        _take_k(x_ref, k, tk, x_resident), w_ref[...],
        dimension_numbers=(((1,), (1,)), ((), ())),   # trans_b: (B,TK) x (TN,TK)^T
        preferred_element_type=jnp.float32)

    @pl.when(k == 0)
    def _():
        out_ref[...] = part

    @pl.when(k > 0)
    def _():
        out_ref[...] += part


def _dense_bn_tanh_train_kernel(x_ref, w_ref, g_ref, beta_ref, out_ref, *,
                                eps, tk, x_resident):
    """Grid = (out_tiles [parallel], k_tiles [arbitrary]); BN stats over the full batch."""
    k = pl.program_id(1)
    _accumulate(x_ref, w_ref, out_ref, k, tk, x_resident)

    @pl.when(k == pl.num_programs(1) - 1)
    def _():
        y = out_ref[...]
        # BatchNorm1d training: biased batch stats. The linear bias is dropped
        # (mean-centering cancels per-feature constants); single-pass variance.
        mean = jnp.mean(y, axis=0, keepdims=True)
        var = jnp.mean(y * y, axis=0, keepdims=True) - mean * mean
        scale = g_ref[...] * jax.lax.rsqrt(var + eps)
        shift = beta_ref[...] - mean * scale
        out_ref[...] = jnp.tanh(y * scale + shift)


def _dense_affine_tanh_kernel(x_ref, w_ref, scale_ref, shift_ref, out_ref, *,
                              tk, x_resident):
    """Eval-mode BN (folded to per-feature scale/shift in the wrapper) or do_norm=False."""
    k = pl.program_id(1)
    _accumulate(x_ref, w_ref, out_ref, k, tk, x_resident)

    @pl.when(k == pl.num_programs(1) - 1)
    def _():
        out_ref[...] = jnp.tanh(out_ref[...] * scale_ref[...] + shift_ref[...])


def dense_batch_tanh(x, weight, bias, gamma=None, beta=None, *,
                     running_mean=None, running_var=None,
                     do_norm=True, is_training=True, eps=1e-5):
    """x: (B, In); weight: (Out, In); bias/gamma/beta/running_*: (Out,).
    Returns (out (B, Out) f32, l2 scalar)."""
    B, In = x.shape
    Out = weight.shape[0]

    w32 = weight.astype(jnp.float32)
    b32 = bias.astype(jnp.float32)
    # L2 regularizer is independent of x -> plain XLA (fused for free), and it
    # doesn't constrain the kernel's tiling.
    l2 = jnp.sum(w32 * w32) + jnp.sum(b32 * b32)

    vmem_bytes = _tpu_vmem_bytes()
    TN, TK, Out_p, In_p, x_resident = _select_tiles(B, In, Out, vmem_bytes)
    pad_n = Out_p - Out

    # bf16 MXU operands with f32 accumulation. Zero-padded K columns / N rows leave
    # the matmul unchanged; padded output columns are sliced off below.
    xp = jnp.pad(x.astype(jnp.float32), ((0, 0), (0, In_p - In))).astype(jnp.bfloat16)
    wp = jnp.pad(w32, ((0, pad_n), (0, In_p - In))).astype(jnp.bfloat16)  # (Out_p, In_p)

    grid = (Out_p // TN, In_p // TK)  # (parallel, arbitrary)

    if x_resident:
        x_spec = pl.BlockSpec((B, In_p), lambda j, k: (0, 0))
    else:
        x_spec = pl.BlockSpec((B, TK), lambda j, k: (0, k))
    w_spec = pl.BlockSpec((TN, TK), lambda j, k: (j, k))       # weight in (Out, In) layout
    vec_spec = pl.BlockSpec((1, TN), lambda j, k: (0, j))
    out_spec = pl.BlockSpec((B, TN), lambda j, k: (0, j))

    if do_norm and is_training:
        g2 = jnp.pad(gamma.astype(jnp.float32), (0, pad_n),
                     constant_values=1.0).reshape(1, Out_p)
        beta2 = jnp.pad(beta.astype(jnp.float32), (0, pad_n)).reshape(1, Out_p)
        kernel = functools.partial(_dense_bn_tanh_train_kernel,
                                   eps=eps, tk=TK, x_resident=x_resident)
        operands = (xp, wp, g2, beta2)
    else:
        if do_norm:
            rm = (jnp.zeros((Out,), jnp.float32) if running_mean is None
                  else running_mean.astype(jnp.float32))
            rv = (jnp.ones((Out,), jnp.float32) if running_var is None
                  else running_var.astype(jnp.float32))
            s = gamma.astype(jnp.float32) * jax.lax.rsqrt(rv + eps)
            scale = s
            shift = (b32 - rm) * s + beta.astype(jnp.float32)
        else:
            scale = jnp.ones((Out,), jnp.float32)
            shift = b32
        scale2 = jnp.pad(scale, (0, pad_n)).reshape(1, Out_p)
        shift2 = jnp.pad(shift, (0, pad_n)).reshape(1, Out_p)
        kernel = functools.partial(_dense_affine_tanh_kernel,
                                   tk=TK, x_resident=x_resident)
        operands = (xp, wp, scale2, shift2)

    out_p = pl.pallas_call(
        kernel,
        out_shape=jax.ShapeDtypeStruct((B, Out_p), jnp.float32),
        grid_spec=pltpu.PrefetchScalarGridSpec(
            num_scalar_prefetch=0,
            grid=grid,
            in_specs=[x_spec, w_spec, vec_spec, vec_spec],
            out_specs=out_spec,
        ),
        compiler_params=pltpu.CompilerParams(
            dimension_semantics=("parallel", "arbitrary"),
            vmem_limit_bytes=int(vmem_bytes * 0.9)),
    )(*operands)

    # TODO(synk): batch (B) axis is not tiled (training BN stats span the whole
    # batch); very large B on v7x's 64 MiB VMEM would need a two-pass B-tiled BN.
    # TODO(synk): PyTorch BatchNorm1d's training-time running_mean/running_var
    # buffer updates (stateful side effect) are not produced here.
    return out_p[:, :Out], l2


def _reference(x, weight, bias, gamma, beta, *, do_norm, is_training,
               running_mean=None, running_var=None, eps=1e-5,
               matmul_dtype=jnp.float32):
    """Pure-JAX reference of the module's forward. `matmul_dtype=bf16` matches the
    kernel's operand precision (accumulation stays f32)."""
    y = jnp.dot(x.astype(matmul_dtype), weight.astype(matmul_dtype).T,
                preferred_element_type=jnp.float32) + bias[None, :]
    if do_norm:
        if is_training:
            mean = jnp.mean(y, axis=0, keepdims=True)
            var = jnp.mean((y - mean) ** 2, axis=0, keepdims=True)
        else:
            mean = (jnp.zeros((1, y.shape[1]), jnp.float32) if running_mean is None
                    else running_mean[None, :].astype(jnp.float32))
            var = (jnp.ones((1, y.shape[1]), jnp.float32) if running_var is None
                   else running_var[None, :].astype(jnp.float32))
        y = (y - mean) * jax.lax.rsqrt(var + eps)
        y = y * gamma[None, :] + beta[None, :]
    out = jnp.tanh(y)
    l2 = jnp.sum(weight.astype(jnp.float32) ** 2) + jnp.sum(bias.astype(jnp.float32) ** 2)
    return out, l2


if __name__ == "__main__":
    key = jax.random.PRNGKey(0)
    B, IN_F, OUT_F = 8, 32, 16

    kx, kw, kb, kg, kbe, krm, krv = jax.random.split(key, 7)
    x = jax.random.normal(kx, (B, IN_F), dtype=jnp.float32)

    # Module-style init (weight ~ N(0, 0.01), bias small) plus generic BN params /
    # running stats so every code path is exercised.
    weight = 0.01 * jax.random.normal(kw, (OUT_F, IN_F), dtype=jnp.float32)
    bias = 0.01 * jax.random.normal(kb, (OUT_F,), dtype=jnp.float32)
    gamma = 1.0 + 0.1 * jax.random.normal(kg, (OUT_F,), dtype=jnp.float32)
    beta = 0.1 * jax.random.normal(kbe, (OUT_F,), dtype=jnp.float32)
    running_mean = 0.01 * jax.random.normal(krm, (OUT_F,), dtype=jnp.float32)
    running_var = 1.0 + 0.1 * jnp.abs(jax.random.normal(krv, (OUT_F,), dtype=jnp.float32))

    cases = [
        dict(do_norm=True, is_training=True),
        dict(do_norm=True, is_training=False,
             running_mean=running_mean, running_var=running_var),
        dict(do_norm=False, is_training=True),
    ]

    ok = True
    for case in cases:
        out, l2 = dense_batch_tanh(x, weight, bias, gamma, beta, **case)
        jax.block_until_ready((out, l2))
        # Compare against a reference that uses the same bf16 operand precision for
        # the matmul (the kernel accumulates in f32, as does the reference).
        ref_out, ref_l2 = _reference(x, weight, bias, gamma, beta,
                                     matmul_dtype=jnp.bfloat16, **case)
        assert out.shape == (B, OUT_F)
        assert l2.shape == ()
        ok &= bool(jnp.allclose(out, ref_out, atol=1e-4, rtol=1e-4))
        ok &= bool(jnp.allclose(l2, ref_l2, atol=1e-5, rtol=1e-5))

    if ok:
        print("KERNEL_OK")
    else:
        print("KERNEL_MISMATCH")
</pallas_src>

<mosaic_0001>
module attributes {stable_mosaic.version = 11 : i64} {
  func.func @_dense_bn_tanh_train_kernel(%arg0: i32, %arg1: i32, %arg2: memref<8x128xbf16, #tpu.memory_space<vmem>>, %arg3: memref<128x128xbf16, #tpu.memory_space<vmem>>, %arg4: memref<1x128xf32, #tpu.memory_space<vmem>>, %arg5: memref<1x128xf32, #tpu.memory_space<vmem>>, %arg6: memref<8x128xf32, #tpu.memory_space<vmem>>) attributes {dimension_semantics = [#tpu.dimension_semantics<parallel>, #tpu.dimension_semantics<arbitrary>], iteration_bounds = array<i64: 1, 1>, scalar_prefetch = 0 : i64, scratch_operands = 0 : i64, tpu.core_type = #tpu.core_type<tc>, window_params = [{pipeline_mode = #tpu.pipeline_mode<synchronous>, transform_indices = @transform_0, window_bounds = array<i64: 8, 128>}, {transform_indices = @transform_1, window_bounds = array<i64: 128, 128>}, {transform_indices = @transform_2, window_bounds = array<i64: 1, 128>}, {transform_indices = @transform_3, window_bounds = array<i64: 1, 128>}, {transform_indices = @transform_4, window_bounds = array<i64: 8, 128>}]} {
    %c128_i32 = arith.constant 128 : i32
    %0 = arith.muli %arg1, %c128_i32 : i32
    %1 = tpu.assume_multiple %0, 128 : i32
    %c0 = arith.constant 0 : index
    %2 = arith.index_cast %1 : i32 to index
    %3 = vector.load %arg2[%c0, %2] : memref<8x128xbf16, #tpu.memory_space<vmem>>, vector<8x128xbf16>
    %c0_0 = arith.constant 0 : index
    %c0_1 = arith.constant 0 : index
    %4 = vector.load %arg3[%c0_0, %c0_1] : memref<128x128xbf16, #tpu.memory_space<vmem>>, vector<128x128xbf16>
    %cst = arith.constant dense<0.000000e+00> : vector<8x128xf32>
    %5 = tpu.matmul %3, %4, %cst {dimension_numbers = #tpu.dot_dimension_numbers<[1], [1], [0], [0], [0, 0, 1, 0], [], []>} : vector<8x128xbf16>, vector<128x128xbf16>, vector<8x128xf32> -> vector<8x128xf32>
    %c0_i32 = arith.constant 0 : i32
    %6 = arith.cmpi eq, %arg1, %c0_i32 : i32
    %7 = arith.extui %6 : i1 to i32
    %c0_i32_2 = arith.constant 0 : i32
    %8 = arith.cmpi ne, %7, %c0_i32_2 : i32
    scf.if %8 {
      %c0_7 = arith.constant 0 : index
      %c0_8 = arith.constant 0 : index
      %15 = vector.load %arg6[%c0_7, %c0_8] : memref<8x128xf32, #tpu.memory_space<vmem>>, vector<8x128xf32>
      tpu.vector_store %arg6[%c0_7, %c0_8], %5 {strides = array<i32>} : memref<8x128xf32, #tpu.memory_space<vmem>>, vector<8x128xf32>,
    } else {
    }
    %c0_i32_3 = arith.constant 0 : i32
    %9 = arith.cmpi sgt, %arg1, %c0_i32_3 : i32
    %10 = arith.extui %9 : i1 to i32
    %c0_i32_4 = arith.constant 0 : i32
    %11 = arith.cmpi ne, %10, %c0_i32_4 : i32
    scf.if %11 {
      %c0_7 = arith.constant 0 : index
      %c0_8 = arith.constant 0 : index
      %15 = vector.load %arg6[%c0_7, %c0_8] : memref<8x128xf32, #tpu.memory_space<vmem>>, vector<8x128xf32>
      %16 = arith.addf %15, %5 : vector<8x128xf32>
      %c0_9 = arith.constant 0 : index
      %c0_10 = arith.constant 0 : index
      %17 = vector.load %arg6[%c0_9, %c0_10] : memref<8x128xf32, #tpu.memory_space<vmem>>, vector<8x128xf32>
      tpu.vector_store %arg6[%c0_9, %c0_10], %16 {strides = array<i32>} : memref<8x128xf32, #tpu.memory_space<vmem>>, vector<8x128xf32>,
    } else {
    }
    %c0_i32_5 = arith.constant 0 : i32
    %12 = arith.cmpi eq, %arg1, %c0_i32_5 : i32
    %13 = arith.extui %12 : i1 to i32
    %c0_i32_6 = arith.constant 0 : i32
    %14 = arith.cmpi ne, %13, %c0_i32_6 : i32
    scf.if %14 {
      %c0_7 = arith.constant 0 : index
      %c0_8 = arith.constant 0 : index
      %15 = vector.load %arg6[%c0_7, %c0_8] : memref<8x128xf32, #tpu.memory_space<vmem>>, vector<8x128xf32>
      %cst_9 = arith.constant dense<0.000000e+00> : vector<128xf32>
      %16 = vector.multi_reduction <add>, %15, %cst_9 [0] : vector<8x128xf32> to vector<128xf32>
      %17 = vector.shape_cast %16 : vector<128xf32> to vector<1x128xf32>
      %cst_10 = arith.constant 8.000000e+00 : f32
      %18 = vector.broadcast %cst_10 : f32 to vector<1x128xf32>
      %19 = arith.divf %17, %18 : vector<1x128xf32>
      %20 = arith.mulf %15, %15 : vector<8x128xf32>
      %cst_11 = arith.constant dense<0.000000e+00> : vector<128xf32>
      %21 = vector.multi_reduction <add>, %20, %cst_11 [0] : vector<8x128xf32> to vector<128xf32>
      %22 = vector.shape_cast %21 : vector<128xf32> to vector<1x128xf32>
      %cst_12 = arith.constant 8.000000e+00 : f32
      %23 = vector.broadcast %cst_12 : f32 to vector<1x128xf32>
      %24 = arith.divf %22, %23 : vector<1x128xf32>
      %25 = arith.mulf %19, %19 : vector<1x128xf32>
      %26 = arith.subf %24, %25 : vector<1x128xf32>
      %c0_13 = arith.constant 0 : index
      %c0_14 = arith.constant 0 : index
      %27 = vector.load %arg4[%c0_13, %c0_14] : memref<1x128xf32, #tpu.memory_space<vmem>>, vector<1x128xf32>
      %cst_15 = arith.constant 9.99999974E-6 : f32
      %28 = vector.broadcast %cst_15 : f32 to vector<1x128xf32>
      %29 = arith.addf %26, %28 : vector<1x128xf32>
      %30 = math.rsqrt %29 : vector<1x128xf32>
      %31 = arith.mulf %27, %30 : vector<1x128xf32>
      %c0_16 = arith.constant 0 : index
      %c0_17 = arith.constant 0 : index
      %32 = vector.load %arg5[%c0_16, %c0_17] : memref<1x128xf32, #tpu.memory_space<vmem>>, vector<1x128xf32>
      %33 = arith.mulf %19, %31 : vector<1x128xf32>
      %34 = arith.subf %32, %33 : vector<1x128xf32>
      %35 = vector.broadcast %31 : vector<1x128xf32> to vector<8x128xf32>
      %36 = arith.mulf %15, %35 : vector<8x128xf32>
      %37 = vector.broadcast %34 : vector<1x128xf32> to vector<8x128xf32>
      %38 = arith.addf %36, %37 : vector<8x128xf32>
      %39 = math.tanh %38 : vector<8x128xf32>
      %c0_18 = arith.constant 0 : index
      %c0_19 = arith.constant 0 : index
      %40 = vector.load %arg6[%c0_18, %c0_19] : memref<8x128xf32, #tpu.memory_space<vmem>>, vector<8x128xf32>
      tpu.vector_store %arg6[%c0_18, %c0_19], %39 {strides = array<i32>} : memref<8x128xf32, #tpu.memory_space<vmem>>, vector<8x128xf32>,
    } else {
    }
    return
  }
  func.func @transform_0(%arg0: i32, %arg1: i32) -> (i32, i32) {
    %c0_i32 = arith.constant 0 : i32
    %c0_i32_0 = arith.constant 0 : i32
    %c0_i32_1 = arith.constant 0 : i32
    return %c0_i32, %c0_i32_0 : i32, i32
  }
  func.func @transform_1(%arg0: i32, %arg1: i32) -> (i32, i32) {
    %c0_i32 = arith.constant 0 : i32
    return %arg0, %arg1 : i32, i32
  }
  func.func @transform_2(%arg0: i32, %arg1: i32) -> (i32, i32) {
    %c0_i32 = arith.constant 0 : i32
    %c0_i32_0 = arith.constant 0 : i32
    return %c0_i32, %arg0 : i32, i32
  }
  func.func @transform_3(%arg0: i32, %arg1: i32) -> (i32, i32) {
    %c0_i32 = arith.constant 0 : i32
    %c0_i32_0 = arith.constant 0 : i32
    return %c0_i32, %arg0 : i32, i32
  }
  func.func @transform_4(%arg0: i32, %arg1: i32) -> (i32, i32) {
    %c0_i32 = arith.constant 0 : i32
    %c0_i32_0 = arith.constant 0 : i32
    return %c0_i32, %arg0 : i32, i32
  }
}

</mosaic_0001>

<llo_original>
// kernel: tpu_custom_call.1
$region0: #{tpu_custom_call.1}
  #allocation0 [shape = 'u32[]', space=smem, size = 0x4, offset = 0x4, fixed_abs, tag = 'smem constant byte address 0x4 - core index']
  #allocation1 [shape = 'u32[144,128]{1,0:T(1,128)}', space=vmem, size = 0x12000, scoped, tag = 'internal scratch']
  %s0 = inlined_call_operand.hbm [shape: bf16[8,128], index: 0, kind: input, shape index: {}]
  %s1 = inlined_call_operand.hbm [shape: bf16[128,128], index: 1, kind: input, shape index: {}]
  %s2 = inlined_call_operand.vmem [shape: f32[1,128], index: 2, kind: input, shape index: {}]
  %s3 = inlined_call_operand.vmem [shape: f32[1,128], index: 3, kind: input, shape index: {}]
  %s4 = inlined_call_operand.hbm [shape: f32[8,128], index: 4, kind: output, shape index: {}]
  %s5 = sld [smem:[#allocation0]]
  $region46: #{tpu_custom_call.1} parent=0
    _
  %s7 = ssub.s32 1, %s5
  %s8 = scalar_select 0, %s7, %s5
  $region1: #{tpu_custom_call.1} parent=0
    #allocation2 [shape = 'u8[2048]{0}', space=vmem, size = 0x800, scoped, tag = 'input window, operand 0, single buffered']
    #allocation3 [shape = 's32[1]{0}', space=sflag, size = 0x4, scoped, tag = 'scoped memory for tpu_custom_call.1']
    #allocation4 [shape = 's32[1]{0}', space=sflag, size = 0x4, scoped, tag = 'scoped memory for tpu_custom_call.1']
    #allocation5 [shape = 'u8[32768]{0}', space=vmem, size = 0x8000, scoped, tag = 'input window, operand 1, single buffered']
    #allocation6 [shape = 's32[1]{0}', space=sflag, size = 0x4, scoped, tag = 'scoped memory for tpu_custom_call.1']
    #allocation7 [shape = 'u8[4096]{0}', space=vmem, size = 0x1000, scoped, tag = 'output window, operand 0, single buffered']
    %9 = vsyncpa [#allocation3], 0
    %10 = vsyncpa [#allocation6], 0
    %11 = vsyncpa [#allocation4], 0
    // Predicated region
    $region2: #{tpu_custom_call.1} parent=1 // pred_check
      _
    $region3: #{tpu_custom_call.1} parent=1 // pred_check_branch
      %13 = sbr.rel (0) target = $region5
    $region4: #{tpu_custom_call.1} parent=1 // pred_region
      %s15 = ssub.s32 64, 64
      %16 = vsyncadd [#allocation3], %s15
      %s18 = sshll.u32 [#allocation2], 4
      %s19 = int_to_ptr.vmem [resolvable:$true] %s18
      %21 = dma.hbm_to_vmem [thread:$0]  %s0, 64, %s19, [#allocation3]
    $region5: #{tpu_custom_call.1} parent=1 // pred_fallthru
      _
    // Predicated region
    $region6: #{tpu_custom_call.1} parent=1 // pred_check
      _
    $region7: #{tpu_custom_call.1} parent=1 // pred_check_branch
      %23 = sbr.rel (0) target = $region9
    $region8: #{tpu_custom_call.1} parent=1 // pred_region
      %s25 = ssub.s32 1024, 1024
      %26 = vsyncadd [#allocation6], %s25
      %s27 = sshll.u32 [#allocation5], 4
      %s28 = int_to_ptr.vmem [resolvable:$true] %s27
      %33 = dma.hbm_to_vmem [thread:$0]  %s1, 1024, %s28, [#allocation6], 64, 64, 4
    $region9: #{tpu_custom_call.1} parent=1 // pred_fallthru
      _
    // Predicated region
    $region10: #{tpu_custom_call.1} parent=1 // pred_check
      _
    $region11: #{tpu_custom_call.1} parent=1 // pred_check_branch
      %35 = sbr.rel (0) target = $region13
    $region12: #{tpu_custom_call.1} parent=1 // pred_region
      _
    $region13: #{tpu_custom_call.1} parent=1 // pred_fallthru
      _
    // Predicated region
    $region14: #{tpu_custom_call.1} parent=1 // pred_check
      _
    $region15: #{tpu_custom_call.1} parent=1 // pred_check_branch
      %37 = sbr.rel (0) target = $region17
    $region16: #{tpu_custom_call.1} parent=1 // pred_region
      _
    $region17: #{tpu_custom_call.1} parent=1 // pred_fallthru
      _
    // Predicated region
    $region18: #{tpu_custom_call.1} parent=1 // pred_check
      _
    $region19: #{tpu_custom_call.1} parent=1 // pred_check_branch
      %39 = sbr.rel (0) target = $region21
    $region20: #{tpu_custom_call.1} parent=1 // pred_region
      %40 = dma.done [#allocation3], 64
    $region21: #{tpu_custom_call.1} parent=1 // pred_fallthru
      _
    // Predicated region
    $region22: #{tpu_custom_call.1} parent=1 // pred_check
      _
    $region23: #{tpu_custom_call.1} parent=1 // pred_check_branch
      %42 = sbr.rel (0) target = $region25
    $region24: #{tpu_custom_call.1} parent=1 // pred_region
      %43 = dma.done [#allocation6], 1024
    $region25: #{tpu_custom_call.1} parent=1 // pred_fallthru
      _
    %s45 = smul.u32 0, 128
    %s46 = sshra.s32 %s45, 7
    %s47 = sand.u32 %s45, 127
    %s48 = smul.addr %s46, 4
    %s49 = scalar_lea.vmem [#allocation2], %s48
    %v50 = vld [vmem:[%s49] sm:$0xf]
    %v51 = vld [vmem:[#allocation5] sm:$0xf]
    %v52 = vld [vmem:[#allocation5 + $0x4] sm:$0xf]
    %v53 = vld [vmem:[#allocation5 + $0x8] sm:$0xf]
    %v54 = vld [vmem:[#allocation5 + $0xc] sm:$0xf]
    %v55 = vld [vmem:[#allocation5 + $0x10] sm:$0xf]
    %v56 = vld [vmem:[#allocation5 + $0x14] sm:$0xf]
    %v57 = vld [vmem:[#allocation5 + $0x18] sm:$0xf]
    %v58 = vld [vmem:[#allocation5 + $0x1c] sm:$0xf]
    %v59 = vld [vmem:[#allocation5 + $0x20] sm:$0xf]
    %v60 = vld [vmem:[#allocation5 + $0x24] sm:$0xf]
    %v61 = vld [vmem:[#allocation5 + $0x28] sm:$0xf]
    %v62 = vld [vmem:[#allocation5 + $0x2c] sm:$0xf]
    %v63 = vld [vmem:[#allocation5 + $0x30] sm:$0xf]
    %v64 = vld [vmem:[#allocation5 + $0x34] sm:$0xf]
    %v65 = vld [vmem:[#allocation5 + $0x38] sm:$0xf]
    %v66 = vld [vmem:[#allocation5 + $0x3c] sm:$0xf]
    %v83 = vunpack.c.l.b16 %v51
    %v84 = vunpack.c.l.b16 %v52
    %v85 = vunpack.c.l.b16 %v53
    %v86 = vunpack.c.l.b16 %v54
    %v87 = vunpack.c.l.b16 %v55
    %v88 = vunpack.c.l.b16 %v56
    %v89 = vunpack.c.l.b16 %v57
    %v90 = vunpack.c.l.b16 %v58
    %v91 = vunpack.c.l.b16 %v59
    %v92 = vunpack.c.l.b16 %v60
    %v93 = vunpack.c.l.b16 %v61
    %v94 = vunpack.c.l.b16 %v62
    %v95 = vunpack.c.l.b16 %v63
    %v96 = vunpack.c.l.b16 %v64
    %v97 = vunpack.c.l.b16 %v65
    %v98 = vunpack.c.l.b16 %v66
    %v99 = vpack.c.b16 %v84, %v83
    %v100 = vpack.c.b16 %v86, %v85
    %v101 = vpack.c.b16 %v88, %v87
    %v102 = vpack.c.b16 %v90, %v89
    %v103 = vpack.c.b16 %v92, %v91
    %v104 = vpack.c.b16 %v94, %v93
    %v105 = vpack.c.b16 %v96, %v95
    %v106 = vpack.c.b16 %v98, %v97
    %115 = vmatprep.subr.bf16.mxu0 0
    %116 = vmatpush1.bf16.xpose.msra.mxu0 %v99
    %117 = vmatprep.subr.bf16.mxu0 0
    %118 = vmatpush1.bf16.xpose.msra.mxu0 %v100
    %119 = vmatprep.subr.bf16.mxu0 0
    %120 = vmatpush1.bf16.xpose.msra.mxu0 %v101
    %121 = vmatprep.subr.bf16.mxu0 0
    %122 = vmatpush1.bf16.xpose.msra.mxu0 %v102
    %123 = vmatprep.subr.bf16.mxu0 0
    %124 = vmatpush1.bf16.xpose.msra.mxu0 %v103
    %125 = vmatprep.subr.bf16.mxu0 0
    %126 = vmatpush1.bf16.xpose.msra.mxu0 %v104
    %127 = vmatprep.subr.bf16.mxu0 0
    %128 = vmatpush1.bf16.xpose.msra.mxu0 %v105
    %129 = vmatprep.subr.bf16.mxu0 0
    %130 = vmatpush1.bf16.xpose.msra.mxu0 %v106
    %131 = vmatprep.subr.bf16.mxu0 0
    %132 = vmatpush1.bf16.xpose.msra.mxu0 0
    %133 = vmatprep.subr.bf16.mxu0 0
    %134 = vmatpush1.bf16.xpose.msra.mxu0 0
    %135 = vmatprep.subr.bf16.mxu0 0
    %136 = vmatpush1.bf16.xpose.msra.mxu0 0
    %137 = vmatprep.subr.bf16.mxu0 0
    %138 = vmatpush1.bf16.xpose.msra.mxu0 0
    %139 = vmatprep.subr.bf16.mxu0 0
    %140 = vmatpush1.bf16.xpose.msra.mxu0 0
    %141 = vmatprep.subr.bf16.mxu0 0
    %142 = vmatpush1.bf16.xpose.msra.mxu0 0
    %143 = vmatprep.subr.bf16.mxu0 0
    %144 = vmatpush1.bf16.xpose.msra.mxu0 0
    %145 = vmatprep.subr.bf16.mxu0 0
    %146 = vmatpush1.bf16.xpose.msra.mxu0 0
    %147 = vmatprep.mubr.bf16.mxu0 0
    %148 = vmatmul.mubr.bf16.gmra.mrb[0].mxu0 %v50
    %v149 = vpop.f32.mrb[0].mxu0
    %v150 = vadd.f32 0.0, %v149
    %v151 = vpop.f32.mrb[0].mxu0
    %v152 = vpop.f32.mrb[0].mxu0
    %v153 = vpop.f32.mrb[0].mxu0
    %154 = vdwg.mxu0
    %p155 = scmp.eq.s32.totalorder 0, 0
    // Predicated region
    $region26: #{tpu_custom_call.1} parent=1 // pred_check
      %p156 = pneg %p155
    $region27: #{tpu_custom_call.1} parent=1 // pred_check_branch
      %158 = sbr.rel (%p156) target = $region29
    $region28: #{tpu_custom_call.1} parent=1 // pred_region
      %159 = vst [vmem:[#allocation7] sm:$0xff] %v150
    $region29: #{tpu_custom_call.1} parent=1 // pred_fallthru
      _
    %p160 = scmp.gt.s32.totalorder 0, 0
    // Predicated region
    $region30: #{tpu_custom_call.1} parent=1 // pred_check
      %p161 = pneg %p160
    $region31: #{tpu_custom_call.1} parent=1 // pred_check_branch
      %163 = sbr.rel (%p161) target = $region33
    $region32: #{tpu_custom_call.1} parent=1 // pred_region
      %v164 = vld [vmem:[#allocation7] sm:$0xff]
      %v165 = vadd.f32 %v164, %v150
      %166 = vst [vmem:[#allocation7] sm:$0xff] %v165
    $region33: #{tpu_custom_call.1} parent=1 // pred_fallthru
      _
    // Predicated region
    $region34: #{tpu_custom_call.1} parent=1 // pred_check
      %p167 = pneg %p155
    $region35: #{tpu_custom_call.1} parent=1 // pred_check_branch
      %169 = sbr.rel (%p167) target = $region37
    $region36: #{tpu_custom_call.1} parent=1 // pred_region
      %v170 = vld [vmem:[#allocation7] sm:$0xff]
      %v171 = vrot.slane %v170, 4
      %v172 = vadd.f32 %v170, %v171
      %v173 = vrot.slane %v172, 2
      %v174 = vadd.f32 %v172, %v173
      %v175 = vrot.slane %v174, 1
      %v176 = vadd.f32 %v174, %v175
      %v177 = vrcp.pop 8.0
      %v178 = vmul.f32 %v176, %v177
      %v179 = vmul.f32 %v170, %v170
      %v180 = vrot.slane %v179, 4
      %v181 = vadd.f32 %v179, %v180
      %v182 = vrot.slane %v181, 2
      %v183 = vadd.f32 %v181, %v182
      %v184 = vrot.slane %v183, 1
      %v185 = vadd.f32 %v183, %v184
      %v186 = vmul.f32 %v185, %v177
      %v187 = vmul.f32 %v178, %v178
      %v188 = vsub.f32 %v186, %v187
      %v189 = vld [vmem:[%s2] sm:$0x1]
      %v190 = vadd.f32 %v188, 1e-05
      %v191 = vrsqrt.pop %v190
      %v192 = vmul.f32 %v189, %v191
      %v193 = vld [vmem:[%s3] sm:$0x1]
      %v194 = vmul.f32 %v178, %v192
      %v195 = vsub.f32 %v193, %v194
      %v197 = vlaneseq
      %v198 = vshrl.u32 %v197, 7
      %v199 = vsub.s32 0, %v198
      %v200 = vrot.slane %v192, %v199
      %v202 = vmul.f32 %v170, %v200
      %v204 = vlaneseq
      %v205 = vshrl.u32 %v204, 7
      %v206 = vsub.s32 0, %v205
      %v207 = vrot.slane %v195, %v206
      %v209 = vadd.f32 %v202, %v207
      %v210 = vtanh.pop %v209
      %211 = vst [vmem:[#allocation7] sm:$0xff] %v210
    $region37: #{tpu_custom_call.1} parent=1 // pred_fallthru
      _
    // Predicated region
    $region38: #{tpu_custom_call.1} parent=1 // pred_check
      _
    $region39: #{tpu_custom_call.1} parent=1 // pred_check_branch
      %213 = sbr.rel (0) target = $region41
    $region40: #{tpu_custom_call.1} parent=1 // pred_region
      %s215 = ssub.s32 128, 128
      %216 = vsyncadd [#allocation4], %s215
      %s218 = sshll.u32 [#allocation7], 4
      %s219 = int_to_ptr.vmem [resolvable:$true] %s218
      %221 = dma.vmem_to_hbm [thread:$0]  %s219, 128, %s4, [#allocation4]
    $region41: #{tpu_custom_call.1} parent=1 // pred_fallthru
      _
    // Predicated region
    $region42: #{tpu_custom_call.1} parent=1 // pred_check
      _
    $region43: #{tpu_custom_call.1} parent=1 // pred_check_branch
      %223 = sbr.rel (0) target = $region45
    $region44: #{tpu_custom_call.1} parent=1 // pred_region
      %224 = dma.done [#allocation4], 128
    $region45: #{tpu_custom_call.1} parent=1 // pred_fallthru
      _
    %225 = vsyncpa [#allocation3], 1
    %226 = vsyncpa [#allocation6], 1
    %227 = vsyncpa [#allocation4], 1

</llo_original>
